<compile_context>
chip_gen: v6e
topology: v6e:2x2x1
jax: 0.10.0
libtpu: 0.0.40
codegen_flags: <defaults>
</compile_context>

<pallas_src>
import jax
import jax.numpy as jnp
from jax.experimental import pallas as pl
from jax.experimental.pallas import tpu as pltpu


def _round_up(x, m):
    return (x + m - 1) // m * m


def _cdiv(a, b):
    return (a + b - 1) // b


def _make_bigram_kernel(want_logits, want_loss):
    """Build a kernel variant that only computes/stores what the caller needs."""

    def kernel(tok_ref, table_ref, *out_refs):
        # tok_ref:   (TN, 2)  int32 VMEM -- lane 0 = token id, lane 1 = target id
        # table_ref: (Vp, Vp) f32   VMEM -- padded table, whole-array resident
        # out_refs:  [logits (TN, Vp)] [rowloss (TN, 1)] depending on variant
        outs = list(out_refs)
        logits_ref = outs.pop(0) if want_logits else None
        rowloss_ref = outs.pop(0) if want_loss else None

        tn = tok_ref.shape[0]
        vp = table_ref.shape[-1]
        lane_ids = jax.lax.broadcasted_iota(jnp.int32, (tn, vp), 1)

        tok = tok_ref[...]                                   # (TN, 2)
        idx = tok[:, 0:1]                                    # (TN, 1)

        # Embedding lookup: one-hot gather via MXU matmul (exact: exactly one
        # nonzero product per output element).
        one_hot = (idx == lane_ids).astype(jnp.float32)      # (TN, Vp)
        logits = jnp.dot(one_hot, table_ref[...],
                         preferred_element_type=jnp.float32)  # (TN, Vp)

        if want_logits:
            logits_ref[...] = logits                          # lane-dense store

        if want_loss:
            tgt = tok[:, 1:2]                                 # (TN, 1)
            # Per-row cross entropy: logsumexp(logits) - logits[target].
            # Pad lanes hold -1e30 (finite!) -> exp underflows to 0; max / lse
            # unchanged; -inf would give NaN via 0 * (-inf) in the matmul.
            m = jnp.max(logits, axis=-1, keepdims=True)
            lse = m + jnp.log(jnp.sum(jnp.exp(logits - m), axis=-1,
                                      keepdims=True))
            picked = jnp.sum(jnp.where(tgt == lane_ids, logits, 0.0),
                             axis=-1, keepdims=True)
            rowloss_ref[...] = lse - picked

    return kernel


def bigram_forward(idx, targets, table, *, block_rows=2048, return_logits=True):
    """idx, targets: (B, T) int (targets may be None); table: (V, V) f32.

    Returns (logits, loss):
      * targets given, return_logits=True : logits (B*T, V), loss scalar
      * targets given, return_logits=False: (None, loss)   -- loss-only fast path
      * targets None                      : logits (B, T, V), None
    Out-of-range token ids (>= V) silently hit padded table rows/columns.
    """
    B, T = idx.shape
    V = table.shape[0]
    N = B * T

    want_loss = targets is not None
    want_logits = return_logits or not want_loss

    V_pad = _round_up(max(V, 128), 128)          # lane-dense vocab axis

    # --- generation-aware VMEM budget -------------------------------------
    try:
        vmem_cap = int(pltpu.get_tpu_info().vmem_capacity_bytes)
    except Exception:
        vmem_cap = 64 << 20                      # conservative (v7x per-TC)
    vmem_budget = max(vmem_cap * 3 // 4, 16 << 20)   # ~48 MiB v7x, ~96 MiB v5e/v6e

    table_bytes = V_pad * V_pad * 4              # resident, single-buffered
    per_row_bytes = 2 * 2 * 4                    # tok tile (int32 x2), double-buffered
    if want_logits:
        per_row_bytes += 2 * V_pad * 4           # logits tile, double-buffered
    if want_loss:
        per_row_bytes += 2 * 4                   # rowloss tile, double-buffered
    headroom = 4 << 20

    rows_fit = max((vmem_budget - table_bytes - headroom) // per_row_bytes, 8)
    rows_fit = max(rows_fit // 8 * 8, 8)
    # Keep >= 2 grid steps so v7x's two TensorCores both get work.
    two_step_rows = max(_round_up(_cdiv(N, 2), 8), 8)
    TN = max(8, min(int(block_rows), two_step_rows, int(rows_fit)))

    N_pad = _round_up(N, TN)
    G = N_pad // TN

    # --- build padded inputs ----------------------------------------------
    if V_pad == V:
        table_pad = table.astype(jnp.float32)
    else:
        table_pad = jnp.full((V_pad, V_pad), -1e30, dtype=jnp.float32)
        table_pad = table_pad.at[:V, :V].set(table.astype(jnp.float32))

    idx_flat = idx.reshape(N).astype(jnp.int32)
    if targets is None:
        tgt_flat = jnp.zeros((N,), jnp.int32)
    else:
        tgt_flat = targets.reshape(N).astype(jnp.int32)
    tok = jnp.stack([idx_flat, tgt_flat], axis=1)            # (N, 2)
    if N_pad != N:
        tok = jnp.pad(tok, ((0, N_pad - N), (0, 0)))

    # --- specs, cost estimate, call ----------------------------------------
    in_specs = [
        pl.BlockSpec((TN, 2), lambda i: (i, 0)),
        # Whole-array resident in VMEM, not part of the pipeline -> single buffer.
        pl.BlockSpec(memory_space=pltpu.MemorySpace.VMEM),
    ]

    out_shape = []
    out_specs = []
    if want_logits:
        out_shape.append(jax.ShapeDtypeStruct((N_pad, V_pad), jnp.float32))
        out_specs.append(pl.BlockSpec((TN, V_pad), lambda i: (i, 0)))
    if want_loss:
        out_shape.append(jax.ShapeDtypeStruct((N_pad, 1), jnp.float32))
        out_specs.append(pl.BlockSpec((TN, 1), lambda i: (i, 0)))

    vmem_limit = int(min(max(table_bytes + TN * per_row_bytes + headroom, 16 << 20),
                         vmem_budget))

    flops = 2 * N_pad * V_pad * V_pad
    transcendentals = N_pad * V_pad if want_loss else 0
    bytes_accessed = (N_pad * 2 * 4 + table_bytes
                      + (N_pad * V_pad * 4 if want_logits else 0)
                      + (N_pad * 4 if want_loss else 0))
    cost = pl.CostEstimate(flops=flops, transcendentals=transcendentals,
                           bytes_accessed=bytes_accessed)

    outs = pl.pallas_call(
        _make_bigram_kernel(want_logits, want_loss),
        grid=(G,),
        in_specs=in_specs,
        out_specs=tuple(out_specs),
        out_shape=tuple(out_shape),
        compiler_params=pltpu.CompilerParams(
            dimension_semantics=("parallel",),
            vmem_limit_bytes=vmem_limit,
        ),
        cost_estimate=cost,
    )(tok, table_pad)

    outs = list(outs)
    logits_out = None
    loss = None

    if want_logits:
        logits_pad = outs.pop(0)
        # Slice only when padding was actually added (avoids an HBM copy
        # whenever N is already a tile multiple and V is lane-aligned).
        if N_pad == N and V_pad == V:
            logits_flat = logits_pad
        else:
            logits_flat = logits_pad[:N, :V]
        if targets is None:
            logits_out = logits_flat.reshape(B, T, V)        # PyTorch: (B, T, C)
        else:
            logits_out = logits_flat                         # PyTorch: view(B*T, C)

    if want_loss:
        row_loss = outs.pop(0)
        valid = row_loss if N_pad == N else row_loss[:N]
        loss = jnp.sum(valid) / jnp.float32(N)               # mean taken exactly once

    return logits_out, loss


if __name__ == "__main__":
    key = jax.random.PRNGKey(0)
    k_table, k_idx, k_tgt = jax.random.split(key, 3)

    vocab_size = 65   # e.g. tiny-Shakespeare character vocab
    B, T = 2, 8

    # nn.Embedding default init: N(0, 1)
    table = jax.random.normal(k_table, (vocab_size, vocab_size), jnp.float32)
    idx = jax.random.randint(k_idx, (B, T), 0, vocab_size, jnp.int32)
    targets = jax.random.randint(k_tgt, (B, T), 0, vocab_size, jnp.int32)

    # Pure-JAX reference.
    ref_logits = table[idx]                                  # (B, T, V)
    ref_flat = ref_logits.reshape(B * T, vocab_size)
    ref_lse = jax.scipy.special.logsumexp(ref_flat, axis=-1)
    ref_picked = jnp.take_along_axis(ref_flat, targets.reshape(-1, 1), axis=-1)[:, 0]
    ref_loss = jnp.mean(ref_lse - ref_picked)

    # Training-style path: logits (B*T, V) + loss (matches PyTorch forward).
    logits, loss = bigram_forward(idx, targets, table)
    jax.block_until_ready((logits, loss))
    assert logits.shape == (B * T, vocab_size)
    assert jnp.allclose(logits, ref_flat, atol=1e-5, rtol=1e-5)
    assert jnp.allclose(loss, ref_loss, atol=1e-5, rtol=1e-5)

    # Inference path: targets=None -> logits (B, T, V), loss None; no row-loss work.
    logits_only, no_loss = bigram_forward(idx, None, table)
    jax.block_until_ready(logits_only)
    assert no_loss is None
    assert logits_only.shape == (B, T, vocab_size)
    assert jnp.allclose(logits_only, ref_logits, atol=1e-5, rtol=1e-5)

    # Loss-only fast path: skips the dominant logits HBM writeback entirely.
    none_logits, loss_fast = bigram_forward(idx, targets, table, return_logits=False)
    jax.block_until_ready(loss_fast)
    assert none_logits is None
    assert jnp.allclose(loss_fast, ref_loss, atol=1e-5, rtol=1e-5)

    print("KERNEL_OK")
</pallas_src>

<mosaic_0001>
module attributes {stable_mosaic.version = 11 : i64} {
  func.func @kernel(%arg0: i32, %arg1: memref<8x2xi32, #tpu.memory_space<vmem>>, %arg2: memref<128x128xf32, #tpu.memory_space<vmem>>, %arg3: memref<8x128xf32, #tpu.memory_space<vmem>>, %arg4: memref<8x1xf32, #tpu.memory_space<vmem>>) attributes {dimension_semantics = [#tpu.dimension_semantics<parallel>], iteration_bounds = array<i64: 2>, scalar_prefetch = 0 : i64, scratch_operands = 0 : i64, tpu.core_type = #tpu.core_type<tc>, window_params = [{transform_indices = @transform_0, window_bounds = array<i64: 8, 2>}, {pipeline_mode = #tpu.pipeline_mode<synchronous>, transform_indices = @transform_1, window_bounds = array<i64: 128, 128>}, {transform_indices = @transform_2, window_bounds = array<i64: 8, 128>}, {transform_indices = @transform_3, window_bounds = array<i64: 8, 1>}]} {
    %0 = tpu.iota {dimensions = array<i32: 1>} : vector<8x128xi32>
    %c0 = arith.constant 0 : index
    %c0_0 = arith.constant 0 : index
    %1 = vector.load %arg1[%c0, %c0_0] : memref<8x2xi32, #tpu.memory_space<vmem>>, vector<8x2xi32>
    %2 = vector.extract_strided_slice %1 {offsets = [0, 0], sizes = [8, 1], strides = [1, 1]} : vector<8x2xi32> to vector<8x1xi32>
    %3 = vector.broadcast %2 : vector<8x1xi32> to vector<8x128xi32>
    %4 = arith.cmpi eq, %3, %0 : vector<8x128xi32>
    %5 = arith.extui %4 : vector<8x128xi1> to vector<8x128xi32>
    %6 = arith.sitofp %5 : vector<8x128xi32> to vector<8x128xf32>
    %c0_1 = arith.constant 0 : index
    %c0_2 = arith.constant 0 : index
    %7 = vector.load %arg2[%c0_1, %c0_2] : memref<128x128xf32, #tpu.memory_space<vmem>>, vector<128x128xf32>
    %cst = arith.constant dense<0.000000e+00> : vector<8x128xf32>
    %8 = tpu.matmul %6, %7, %cst {dimension_numbers = #tpu.dot_dimension_numbers<[1], [0], [0], [1], [0, 0, 1, 1], [], []>} : vector<8x128xf32>, vector<128x128xf32>, vector<8x128xf32> -> vector<8x128xf32>
    %c0_3 = arith.constant 0 : index
    %c0_4 = arith.constant 0 : index
    %9 = vector.load %arg3[%c0_3, %c0_4] : memref<8x128xf32, #tpu.memory_space<vmem>>, vector<8x128xf32>
    tpu.vector_store %arg3[%c0_3, %c0_4], %8 {strides = array<i32>} : memref<8x128xf32, #tpu.memory_space<vmem>>, vector<8x128xf32>,
    %10 = vector.extract_strided_slice %1 {offsets = [0, 1], sizes = [8, 1], strides = [1, 1]} : vector<8x2xi32> to vector<8x1xi32>
    %cst_5 = arith.constant dense<0xFF800000> : vector<8xf32>
    %11 = vector.multi_reduction <maximumf>, %8, %cst_5 [1] : vector<8x128xf32> to vector<8xf32>
    %12 = vector.shape_cast %11 : vector<8xf32> to vector<8x1xf32>
    %13 = vector.broadcast %12 : vector<8x1xf32> to vector<8x128xf32>
    %14 = arith.subf %8, %13 : vector<8x128xf32>
    %15 = math.exp %14 : vector<8x128xf32>
    %cst_6 = arith.constant dense<0.000000e+00> : vector<8xf32>
    %16 = vector.multi_reduction <add>, %15, %cst_6 [1] : vector<8x128xf32> to vector<8xf32>
    %17 = vector.shape_cast %16 : vector<8xf32> to vector<8x1xf32>
    %18 = math.log %17 : vector<8x1xf32>
    %19 = arith.addf %12, %18 : vector<8x1xf32>
    %20 = vector.broadcast %10 : vector<8x1xi32> to vector<8x128xi32>
    %21 = arith.cmpi eq, %20, %0 : vector<8x128xi32>
    %cst_7 = arith.constant 0.000000e+00 : f32
    %22 = vector.broadcast %cst_7 : f32 to vector<8x128xf32>
    %23 = arith.select %21, %8, %22 : vector<8x128xi1>, vector<8x128xf32>
    %cst_8 = arith.constant dense<0.000000e+00> : vector<8xf32>
    %24 = vector.multi_reduction <add>, %23, %cst_8 [1] : vector<8x128xf32> to vector<8xf32>
    %25 = vector.shape_cast %24 : vector<8xf32> to vector<8x1xf32>
    %26 = arith.subf %19, %25 : vector<8x1xf32>
    %c0_9 = arith.constant 0 : index
    %c0_10 = arith.constant 0 : index
    %27 = vector.load %arg4[%c0_9, %c0_10] : memref<8x1xf32, #tpu.memory_space<vmem>>, vector<8x1xf32>
    tpu.vector_store %arg4[%c0_9, %c0_10], %26 {strides = array<i32>} : memref<8x1xf32, #tpu.memory_space<vmem>>, vector<8x1xf32>,
    return
  }
  func.func @transform_0(%arg0: i32) -> (i32, i32) {
    %c0_i32 = arith.constant 0 : i32
    %c0_i32_0 = arith.constant 0 : i32
    return %arg0, %c0_i32 : i32, i32
  }
  func.func @transform_1(%arg0: i32) -> (i32, i32) {
    %c0_i32 = arith.constant 0 : i32
    %c0_i32_0 = arith.constant 0 : i32
    %c0_i32_1 = arith.constant 0 : i32
    return %c0_i32, %c0_i32_0 : i32, i32
  }
  func.func @transform_2(%arg0: i32) -> (i32, i32) {
    %c0_i32 = arith.constant 0 : i32
    %c0_i32_0 = arith.constant 0 : i32
    return %arg0, %c0_i32 : i32, i32
  }
  func.func @transform_3(%arg0: i32) -> (i32, i32) {
    %c0_i32 = arith.constant 0 : i32
    %c0_i32_0 = arith.constant 0 : i32
    return %arg0, %c0_i32 : i32, i32
  }
}

</mosaic_0001>

<llo_original>
// kernel: tpu_custom_call.1
$region0: #{tpu_custom_call.1}
  #allocation0 [shape = 'u32[]', space=smem, size = 0x4, offset = 0x4, fixed_abs, tag = 'smem constant byte address 0x4 - core index']
  #allocation1 [shape = 'u32[144,128]{1,0:T(1,128)}', space=vmem, size = 0x12000, scoped, tag = 'internal scratch']
  %s0 = inlined_call_operand.vmem [shape: s32[16,2], index: 0, kind: input, shape index: {}]
  %s1 = inlined_call_operand.hbm [shape: f32[128,128], index: 1, kind: input, shape index: {}]
  %s2 = inlined_call_operand.hbm [shape: f32[16,128], index: 2, kind: output, shape index: {0}]
  %s3 = inlined_call_operand.vmem [shape: f32[16,1], index: 3, kind: output, shape index: {1}]
  %4 = xla_tuple %s2, %s3
  %s5 = sld [smem:[#allocation0]]
  $region53: #{tpu_custom_call.1} parent=0
    _
  %s7 = ssub.s32 1, %s5
  %s8 = scalar_select 0, %s7, %s5
  $region1: #{tpu_custom_call.1} parent=0
    #allocation2 [shape = 'u8[65536]{0}', space=vmem, size = 0x10000, scoped, tag = 'input window, operand 1, single buffered']
    #allocation3 [shape = 's32[2]{0}', space=sflag, size = 0x8, scoped, tag = 'scoped memory for tpu_custom_call.1']
    #allocation4 [shape = 's32[2]{0}', space=sflag, size = 0x8, scoped, tag = 'scoped memory for tpu_custom_call.1']
    #allocation5 [shape = 'u8[8192]{0}', space=vmem, size = 0x2000, scoped, tag = 'output window, operand 0']
    %9 = vsyncpa [#allocation3], 0
    %10 = vsyncpa [#allocation4], 0
    %s11 = scalar_lea.sflag [#allocation4], 1
    %12 = vsyncpa %s11, 0
    loop: start=0, step=1, limit=4
    $region2: #{tpu_custom_call.1} parent=1 // loop_pre_header
      _
    $region3: #{tpu_custom_call.1} parent=1 // loop_header
      %s14 = sphi 0, %s18
      %p15 = scmp.ge.s32.totalorder %s14, 4
      %s24 = sphi 0, %s26
      %s27 = sphi 0, %s24
      %s28 = sphi 0, %s27
      %s44 = sphi 0, %s28
      %s48 = sphi 0, %s48
      %s50 = sphi 0, %s48
      %s51 = sphi 0, %s50
      %s65 = sphi 0, %s51
      %s71 = sphi 0, %s73
      %s74 = sphi 0, %s71
      %s75 = sphi 0, %s74
      %s91 = sphi 0, %s75
      %s97 = sphi 0, %s99
      %s100 = sphi 0, %s97
      %s101 = sphi 0, %s100
      %s117 = sphi 0, %s101
    $region4: #{tpu_custom_call.1} parent=1 // loop_header_branch
      %17 = sbr.rel (%p15) target = $region8
    $region5: #{tpu_custom_call.1} parent=1 // loop_body
      %s19 = ssub.s32 %s14, 1
      %s20 = ssub.s32 %s14, 2
      %s21 = sadd.s32 %s14, 1
      %s22 = ssub.s32 %s14, %s21
      %p23 = scmp.eq.s32.totalorder %s22, 0
      %s25 = sadd.s32 %s24, 1
      %s26 = scalar_select %p23, %s24, %s25
      %p29 = pneg %p23
      %p30 = scmp.eq.s32.totalorder %s14, 1
      %p31 = por %p29, %p30
      %p32 = scmp.ne.s32.totalorder %s24, %s27
      %p33 = scmp.eq.s32.totalorder %s14, 0
      %p34 = por %p32, %p33
      %p35 = scmp.ne.s32.totalorder %s24, %s27
      %p36 = scmp.eq.s32.totalorder %s19, 1
      %p37 = por %p35, %p36
      %p38 = scmp.ne.s32.totalorder %s27, %s28
      %p39 = scmp.eq.s32.totalorder %s19, 0
      %p40 = por %p38, %p39
      %p41 = scmp.ne.s32.totalorder %s27, %s28
      %p42 = scmp.eq.s32.totalorder %s20, 1
      %p43 = por %p41, %p42
      %p45 = scmp.ne.s32.totalorder %s28, %s44
      %p46 = scmp.eq.s32.totalorder %s20, 0
      %p47 = por %p45, %p46
      %s49 = sadd.s32 %s48, 1
      %p52 = scmp.eq.s32.totalorder %s14, 1
      %p53 = scmp.ne.s32.totalorder %s48, %s50
      %p54 = scmp.eq.s32.totalorder %s14, 0
      %p55 = por %p53, %p54
      %p56 = scmp.ne.s32.totalorder %s48, %s50
      %p57 = scmp.eq.s32.totalorder %s19, 1
      %p58 = por %p56, %p57
      %p59 = scmp.ne.s32.totalorder %s50, %s51
      %p60 = scmp.eq.s32.totalorder %s19, 0
      %p61 = por %p59, %p60
      %p62 = scmp.ne.s32.totalorder %s50, %s51
      %p63 = scmp.eq.s32.totalorder %s20, 1
      %p64 = por %p62, %p63
      %p66 = scmp.ne.s32.totalorder %s51, %s65
      %p67 = scmp.eq.s32.totalorder %s20, 0
      %p68 = por %p66, %p67
      %s69 = ssub.s32 %s14, %s21
      %p70 = scmp.eq.s32.totalorder %s69, 0
      %s72 = sadd.s32 %s71, 1
      %s73 = scalar_select %p70, %s71, %s72
      %p76 = pneg %p70
      %p77 = scmp.eq.s32.totalorder %s14, 1
      %p78 = por %p76, %p77
      %p79 = scmp.ne.s32.totalorder %s71, %s74
      %p80 = scmp.eq.s32.totalorder %s14, 0
      %p81 = por %p79, %p80
      %p82 = scmp.ne.s32.totalorder %s71, %s74
      %p83 = scmp.eq.s32.totalorder %s19, 1
      %p84 = por %p82, %p83
      %p85 = scmp.ne.s32.totalorder %s74, %s75
      %p86 = scmp.eq.s32.totalorder %s19, 0
      %p87 = por %p85, %p86
      %p88 = scmp.ne.s32.totalorder %s74, %s75
      %p89 = scmp.eq.s32.totalorder %s20, 1
      %p90 = por %p88, %p89
      %p92 = scmp.ne.s32.totalorder %s75, %s91
      %p93 = scmp.eq.s32.totalorder %s20, 0
      %p94 = por %p92, %p93
      %s95 = ssub.s32 %s14, %s21
      %p96 = scmp.eq.s32.totalorder %s95, 0
      %s98 = sadd.s32 %s97, 1
      %s99 = scalar_select %p96, %s97, %s98
      %p102 = pneg %p96
      %p103 = scmp.eq.s32.totalorder %s14, 1
      %p104 = por %p102, %p103
      %p105 = scmp.ne.s32.totalorder %s97, %s100
      %p106 = scmp.eq.s32.totalorder %s14, 0
      %p107 = por %p105, %p106
      %p108 = scmp.ne.s32.totalorder %s97, %s100
      %p109 = scmp.eq.s32.totalorder %s19, 1
      %p110 = por %p108, %p109
      %p111 = scmp.ne.s32.totalorder %s100, %s101
      %p112 = scmp.eq.s32.totalorder %s19, 0
      %p113 = por %p111, %p112
      %p114 = scmp.ne.s32.totalorder %s100, %s101
      %p115 = scmp.eq.s32.totalorder %s20, 1
      %p116 = por %p114, %p115
      %p118 = scmp.ne.s32.totalorder %s101, %s117
      %p119 = scmp.eq.s32.totalorder %s20, 0
      %p120 = por %p118, %p119
      %p121 = scmp.le.s32.totalorder 1, %s14
      %p122 = scmp.lt.s32.totalorder %s14, 3
      %p123 = pnand %p121, %p122
      %p124 = pneg %p123
      // Predicated region
      $region9: #{tpu_custom_call.1} parent=5 // pred_check
        _
      $region10: #{tpu_custom_call.1} parent=5 // pred_check_branch
        %126 = sbr.rel (%p123) target = $region12
      $region11: #{tpu_custom_call.1} parent=5 // pred_region
        %s127 = ssub.s32 %s14, 1
        // Predicated region
        $region13: #{tpu_custom_call.1} parent=11 // pred_check
          %p128 = pneg %p61
        $region14: #{tpu_custom_call.1} parent=11 // pred_check_branch
          %130 = sbr.rel (%p128) target = $region16
        $region15: #{tpu_custom_call.1} parent=11 // pred_region
          %s132 = ssub.s32 2048, 2048
          %133 = vsyncadd [#allocation3], %s132
          %s134 = sshll.u32 [#allocation2], 4
          %s135 = int_to_ptr.vmem [resolvable:$true] %s134
          %140 = dma.hbm_to_vmem [thread:$0]  %s1, 2048, %s135, [#allocation3], 128, 128, 8
        $region16: #{tpu_custom_call.1} parent=11 // pred_fallthru
          _
      $region12: #{tpu_custom_call.1} parent=5 // pred_fallthru
        _
      %p141 = scmp.lt.s32.totalorder %s14, 2
      // Predicated region
      $region17: #{tpu_custom_call.1} parent=5 // pred_check
        %p142 = pneg %p141
      $region18: #{tpu_custom_call.1} parent=5 // pred_check_branch
        %144 = sbr.rel (%p142) target = $region20
      $region19: #{tpu_custom_call.1} parent=5 // pred_region
        // Predicated region
        $region21: #{tpu_custom_call.1} parent=19 // pred_check
          %p145 = pneg %p34
        $region22: #{tpu_custom_call.1} parent=19 // pred_check_branch
          %147 = sbr.rel (%p145) target = $region24
        $region23: #{tpu_custom_call.1} parent=19 // pred_region
          %p148 = scmp.lt.s32.totalorder %s14, 1
          %s149 = scalar_select %p148, %s14, 1
          %s150 = smul.addr %s149, 8
          %s151 = scalar_lea.vmem %s0, %s150
        $region24: #{tpu_custom_call.1} parent=19 // pred_fallthru
          _
      $region20: #{tpu_custom_call.1} parent=5 // pred_fallthru
        _
      %p152 = scmp.le.s32.totalorder 1, %s14
      %p153 = scmp.lt.s32.totalorder %s14, 3
      %p154 = pnand %p152, %p153
      %p155 = pneg %p154
      // Predicated region
      $region25: #{tpu_custom_call.1} parent=5 // pred_check
        _
      $region26: #{tpu_custom_call.1} parent=5 // pred_check_branch
        %157 = sbr.rel (%p154) target = $region28
      $region27: #{tpu_custom_call.1} parent=5 // pred_region
        %s158 = ssub.s32 %s14, 1
        // Predicated region
        $region29: #{tpu_custom_call.1} parent=27 // pred_check
          %p159 = pneg %p61
        $region30: #{tpu_custom_call.1} parent=27 // pred_check_branch
          %161 = sbr.rel (%p159) target = $region32
        $region31: #{tpu_custom_call.1} parent=27 // pred_region
          %162 = dma.done [#allocation3], 2048
        $region32: #{tpu_custom_call.1} parent=27 // pred_fallthru
          _
        %p163 = scmp.lt.s32.totalorder %s19, 1
        %s164 = scalar_select %p163, %s19, 1
        %s165 = smul.addr %s164, 8
        %s166 = scalar_lea.vmem %s0, %s165
        %p167 = pneg %p40
        %p168 = pneg %p37
        %p169 = pneg %p61
        %p170 = pneg %p58
        %p171 = pneg %p87
        %p172 = pneg %p84
        %s173 = sand.u32 %s74, 1
        %s174 = scalar_lea.sflag [#allocation4], %s173
        %s175 = sand.u32 %s74, 1
        %s176 = smul.addr %s175, 8
        %s177 = scalar_lea.vmem [#allocation5], %s176
        %p178 = pneg %p113
        %p179 = pneg %p110
        %p180 = scmp.lt.s32.totalorder %s19, 1
        %s181 = scalar_select %p180, %s19, 1
        %s182 = smul.addr %s181, 8
        %s183 = scalar_lea.vmem %s3, %s182
        %p184 = scmp.lt.s32.totalorder %s19, 1
        %s185 = scalar_select %p184, %s19, 1
        %s186 = smul.addr %s185, 8
        %s187 = scalar_lea.vmem %s0, %s186
        %p188 = scmp.lt.s32.totalorder %s19, 1
        %s189 = scalar_select %p188, %s19, 1
        %s190 = smul.addr %s189, 8
        %s191 = scalar_lea.vmem %s3, %s190
        %v192 = vlaneseq
        %v193 = vand.u32 %v192, 127
        %v194 = vld [vmem:[%s187] sm:$0xff]
        %195 = vset.pattern.permute.xlu0 0
        %196 = vperm.xlu0 %195, %v194
        %v197 = vpop.permute.xlu0 %196
        %vm198 = vcmp.eq.s32.totalorder %v197, %v193
        %v199 = vsel %vm198, 1, 0
        %v200 = vcvt.s32.f32 %v199
        %v201 = vld [vmem:[#allocation2] sm:$0xff]
        %v202 = vld [vmem:[#allocation2 + $0x8] sm:$0xff]
        %v203 = vld [vmem:[#allocation2 + $0x10] sm:$0xff]
        %v204 = vld [vmem:[#allocation2 + $0x18] sm:$0xff]
        %v205 = vld [vmem:[#allocation2 + $0x20] sm:$0xff]
        %v206 = vld [vmem:[#allocation2 + $0x28] sm:$0xff]
        %v207 = vld [vmem:[#allocation2 + $0x30] sm:$0xff]
        %v208 = vld [vmem:[#allocation2 + $0x38] sm:$0xff]
        %v209 = vld [vmem:[#allocation2 + $0x40] sm:$0xff]
        %v210 = vld [vmem:[#allocation2 + $0x48] sm:$0xff]
        %v211 = vld [vmem:[#allocation2 + $0x50] sm:$0xff]
        %v212 = vld [vmem:[#allocation2 + $0x58] sm:$0xff]
        %v213 = vld [vmem:[#allocation2 + $0x60] sm:$0xff]
        %v214 = vld [vmem:[#allocation2 + $0x68] sm:$0xff]
        %v215 = vld [vmem:[#allocation2 + $0x70] sm:$0xff]
        %v216 = vld [vmem:[#allocation2 + $0x78] sm:$0xff]
        %217 = vmatprep.subr.mxu0 0.0
        %218 = vmatpush1.msra.mxu0 %v216
        %219 = vmatprep.subr.mxu0 0.0
        %220 = vmatpush1.msra.mxu0 %v215
        %221 = vmatprep.subr.mxu0 0.0
        %222 = vmatpush1.msra.mxu0 %v214
        %223 = vmatprep.subr.mxu0 0.0
        %224 = vmatpush1.msra.mxu0 %v213
        %225 = vmatprep.subr.mxu0 0.0
        %226 = vmatpush1.msra.mxu0 %v212
        %227 = vmatprep.subr.mxu0 0.0
        %228 = vmatpush1.msra.mxu0 %v211
        %229 = vmatprep.subr.mxu0 0.0
        %230 = vmatpush1.msra.mxu0 %v210
        %231 = vmatprep.subr.mxu0 0.0
        %232 = vmatpush1.msra.mxu0 %v209
        %233 = vmatprep.subr.mxu0 0.0
        %234 = vmatpush1.msra.mxu0 %v208
        %235 = vmatprep.subr.mxu0 0.0
        %236 = vmatpush1.msra.mxu0 %v207
        %237 = vmatprep.subr.mxu0 0.0
        %238 = vmatpush1.msra.mxu0 %v206
        %239 = vmatprep.subr.mxu0 0.0
        %240 = vmatpush1.msra.mxu0 %v205
        %241 = vmatprep.subr.mxu0 0.0
        %242 = vmatpush1.msra.mxu0 %v204
        %243 = vmatprep.subr.mxu0 0.0
        %244 = vmatpush1.msra.mxu0 %v203
        %245 = vmatprep.subr.mxu0 0.0
        %246 = vmatpush1.msra.mxu0 %v202
        %247 = vmatprep.subr.mxu0 0.0
        %248 = vmatpush1.msra.mxu0 %v201
        %249 = vmatprep.subr.mxu0 0.0
        %250 = vmatpush2.msra.mxu0 0.0
        %251 = vmatprep.subr.mxu0 0.0
        %252 = vmatpush2.msra.mxu0 0.0
        %253 = vmatprep.subr.mxu0 0.0
        %254 = vmatpush2.msra.mxu0 0.0
        %255 = vmatprep.subr.mxu0 0.0
        %256 = vmatpush2.msra.mxu0 0.0
        %257 = vmatprep.subr.mxu0 0.0
        %258 = vmatpush2.msra.mxu0 0.0
        %259 = vmatprep.subr.mxu0 0.0
        %260 = vmatpush2.msra.mxu0 0.0
        %261 = vmatprep.subr.mxu0 0.0
        %262 = vmatpush2.msra.mxu0 0.0
        %263 = vmatprep.subr.mxu0 0.0
        %264 = vmatpush2.msra.mxu0 0.0
        %265 = vmatprep.subr.mxu0 0.0
        %266 = vmatpush2.msra.mxu0 0.0
        %267 = vmatprep.subr.mxu0 0.0
        %268 = vmatpush2.msra.mxu0 0.0
        %269 = vmatprep.subr.mxu0 0.0
        %270 = vmatpush2.msra.mxu0 0.0
        %271 = vmatprep.subr.mxu0 0.0
        %272 = vmatpush2.msra.mxu0 0.0
        %273 = vmatprep.subr.mxu0 0.0
        %274 = vmatpush2.msra.mxu0 0.0
        %275 = vmatprep.subr.mxu0 0.0
        %276 = vmatpush2.msra.mxu0 0.0
        %277 = vmatprep.subr.mxu0 0.0
        %278 = vmatpush2.msra.mxu0 0.0
        %279 = vmatprep.subr.mxu0 0.0
        %280 = vmatpush2.msra.mxu0 0.0
        %281 = vmatprep.mubr.f32.mxu0 0.0
        %282 = vmatmul.mubr.f32.gmra.mxu0 %v200
        %v283 = vpop.f32.mrf.mxu0
        %v284 = vadd.f32 0.0, %v283
        %v285 = vpop.f32.mrf.mxu0
        %286 = vdwg.mxu0
        %287 = vst [vmem:[%s177] sm:$0xff] %v284
        %288 = vmax.xlane.f32.xlu0 %v284
        %v289 = vpop.xlane.xlu0 %288
        %v290 = vsub.f32 %v284, %v289
        %v291 = vmul.f32 %v290, 1.442695
        %v292 = vpow.pop %v291
        %293 = vadd.xlane.f32.xlu0 %v292
        %v294 = vpop.xlane.xlu0 %293
        %v295 = vlog2.pop %v294
        %v296 = vmul.f32 %v295, 0.6931472
        %v297 = vadd.f32 %v289, %v296
        %298 = vset.pattern.permute.xlu0 1
        %299 = vperm.xlu0 %298, %v194
        %v300 = vpop.permute.xlu0 %299
        %vm301 = vcmp.eq.s32.totalorder %v300, %v193
        %v302 = vsel %vm301, %v284, 0.0
        %303 = vadd.xlane.f32.xlu0 %v302
        %v304 = vpop.xlane.xlu0 %303
        %v305 = vsub.f32 %v297, %v304
        %vm306 = vcmask 7168
        %307 = vst.msk [vmem:[%s191] sm:$0xff] %vm306, %v305
        %s308 = sand.u32 %s74, 1
        %s309 = scalar_lea.sflag [#allocation4], %s308
        %s310 = sand.u32 %s74, 1
        %s311 = smul.addr %s310, 8
        %s312 = scalar_lea.vmem [#allocation5], %s311
        %p313 = scmp.lt.s32.totalorder %s19, 1
        %s314 = scalar_select %p313, %s19, 1
        %s315 = smul.addr %s314, 8
        %s316 = scalar_lea.vmem %s3, %s315
        // Predicated region
        $region33: #{tpu_custom_call.1} parent=27 // pred_check
          %p317 = pneg %p84
        $region34: #{tpu_custom_call.1} parent=27 // pred_check_branch
          %319 = sbr.rel (%p317) target = $region36
        $region35: #{tpu_custom_call.1} parent=27 // pred_region
          %s321 = ssub.s32 128, 128
          %322 = vsyncadd %s309, %s321
          %s323 = smul.addr %s19, 128
          %s324 = scalar_lea.hbm %s2, %s323
          %s326 = sshll.u32 %s312, 4
          %s327 = int_to_ptr.vmem [resolvable:$true] %s326
          %329 = dma.vmem_to_hbm [thread:$0]  %s327, 128, %s324, %s309
        $region36: #{tpu_custom_call.1} parent=27 // pred_fallthru
          _
        // Predicated region
        $region37: #{tpu_custom_call.1} parent=27 // pred_check
          %p330 = pneg %p110
        $region38: #{tpu_custom_call.1} parent=27 // pred_check_branch
          %332 = sbr.rel (%p330) target = $region40
        $region39: #{tpu_custom_call.1} parent=27 // pred_region
          _
        $region40: #{tpu_custom_call.1} parent=27 // pred_fallthru
          _
      $region28: #{tpu_custom_call.1} parent=5 // pred_fallthru
        _
      %p333 = scmp.le.s32.totalorder 2, %s14
      // Predicated region
      $region41: #{tpu_custom_call.1} parent=5 // pred_check
        %p334 = pneg %p333
      $region42: #{tpu_custom_call.1} parent=5 // pred_check_branch
        %336 = sbr.rel (%p334) target = $region44
      $region43: #{tpu_custom_call.1} parent=5 // pred_region
        %s337 = ssub.s32 %s14, 2
        // Predicated region
        $region45: #{tpu_custom_call.1} parent=43 // pred_check
          %p338 = pneg %p90
        $region46: #{tpu_custom_call.1} parent=43 // pred_check_branch
          %340 = sbr.rel (%p338) target = $region48
        $region47: #{tpu_custom_call.1} parent=43 // pred_region
          %s341 = sand.u32 %s75, 1
          %s342 = scalar_lea.sflag [#allocation4], %s341
          %s343 = sand.u32 %s75, 1
          %s344 = smul.addr %s343, 8
          %s345 = scalar_lea.vmem [#allocation5], %s344
          %346 = dma.done %s342, 128
        $region48: #{tpu_custom_call.1} parent=43 // pred_fallthru
          _
        // Predicated region
        $region49: #{tpu_custom_call.1} parent=43 // pred_check
          %p347 = pneg %p116
        $region50: #{tpu_custom_call.1} parent=43 // pred_check_branch
          %349 = sbr.rel (%p347) target = $region52
        $region51: #{tpu_custom_call.1} parent=43 // pred_region
          %p350 = scmp.lt.s32.totalorder %s20, 1
          %s351 = scalar_select %p350, %s20, 1
          %s352 = smul.addr %s351, 8
          %s353 = scalar_lea.vmem %s3, %s352
        $region52: #{tpu_custom_call.1} parent=43 // pred_fallthru
          _
      $region44: #{tpu_custom_call.1} parent=5 // pred_fallthru
        _
    $region6: #{tpu_custom_call.1} parent=1 // loop_footer
      %s18 = sadd.s32 1, %s14
    $region7: #{tpu_custom_call.1} parent=1 // loop_footer_branch
      %13 = sbr.rel target = $region3
    $region8: #{tpu_custom_call.1} parent=1 // loop_exit
      _
    %354 = vsyncpa [#allocation3], 1
    %s355 = scalar_lea.sflag [#allocation3], 1
    %356 = vsyncpa %s355, 1
    %357 = vsyncpa [#allocation4], 1
    %s358 = scalar_lea.sflag [#allocation4], 1
    %359 = vsyncpa %s358, 1

</llo_original>
